<compile_context>
chip_gen: v5e
topology: v5e:2x2
jax: 0.10.0
libtpu: 0.0.40
codegen_flags: <defaults>
</compile_context>

<pallas_src>
import jax
import jax.numpy as jnp
from jax import lax
from jax.experimental import pallas as pl
from jax.experimental.pallas import tpu as pltpu

_LANES = 128


def _mlp_kernel(x_ref, w1_ref, b1_ref, w2_ref, b2_ref, o_ref):
    # x : (tb, C_in)        streamed batch tile
    # w1: (hidden, C_in)    resident (PyTorch nn.Linear layout)
    # b1: (hidden, 1)
    # w2: (C_out, hidden)   resident (PyTorch nn.Linear layout)
    # b2: (C_out, 1)
    # o : (C_out, tb)       batch on lanes -> lane-dense, unmasked stores
    #
    # h_t = W1 @ x^T : contract the C_in axis of both operands on the MXU.
    h = lax.dot_general(
        w1_ref[...], x_ref[...],
        dimension_numbers=(((1,), (1,)), ((), ())),
        preferred_element_type=jnp.float32,
    )
    h = jnp.maximum(h + b1_ref[...], 0.0)                         # bias + ReLU (f32)
    y = jnp.dot(w2_ref[...], h, preferred_element_type=jnp.float32) + b2_ref[...]
    o_ref[...] = y.astype(o_ref.dtype)


def _choose_batch_tile(batch, cap):
    """Lane-aligned batch tile: as large as possible (amortize per-step
    overhead), and giving >= 2 grid steps whenever the batch allows it."""
    cap = max(_LANES, (cap // _LANES) * _LANES)
    b128 = ((batch + _LANES - 1) // _LANES) * _LANES
    if b128 <= _LANES:
        return _LANES                               # tiny batch: single 128-lane tile
    half = max(_LANES, (b128 // 2) // _LANES * _LANES)   # guarantees >= 2 steps
    return min(cap, half)


def specific_classifier(x, w1, b1, w2, b2, *, tb_cap=2048):
    """Fused forward of Linear(C_in, 64) -> ReLU -> Linear(64, C_out).

    x  : (B, C_in)
    w1 : (hidden, C_in)   -- native PyTorch nn.Linear weight layout
    b1 : (hidden,)
    w2 : (C_out, hidden)  -- native PyTorch nn.Linear weight layout
    b2 : (C_out,)
    returns (B, C_out)
    """
    B, C_in = x.shape
    hidden = w1.shape[0]
    C_out = w2.shape[0]

    tb = _choose_batch_tile(B, tb_cap)
    b_pad = ((B + tb - 1) // tb) * tb
    if b_pad != B:
        x = jnp.pad(x, ((0, b_pad - B), (0, 0)))     # padded rows sliced off below
    grid = (b_pad // tb,)

    b1c = jnp.asarray(b1, jnp.float32).reshape(hidden, 1)
    b2c = jnp.asarray(b2, jnp.float32).reshape(C_out, 1)

    itemsize = jnp.dtype(x.dtype).itemsize
    cost = pl.CostEstimate(
        flops=2 * b_pad * (C_in * hidden + hidden * C_out),
        transcendentals=0,
        bytes_accessed=(b_pad * C_in * itemsize            # x stream
                        + b_pad * C_out * itemsize         # output stream
                        + (w1.size + w2.size) * itemsize   # resident weights
                        + (hidden + C_out) * 4),           # biases
    )

    out_t = pl.pallas_call(
        _mlp_kernel,
        out_shape=jax.ShapeDtypeStruct((C_out, b_pad), x.dtype),
        grid_spec=pltpu.PrefetchScalarGridSpec(
            num_scalar_prefetch=0,
            grid=grid,
            in_specs=[
                pl.BlockSpec((tb, C_in), lambda i: (i, 0)),        # x tile (streamed)
                pl.BlockSpec((hidden, C_in), lambda i: (0, 0)),    # w1 (resident)
                pl.BlockSpec((hidden, 1), lambda i: (0, 0)),       # b1
                pl.BlockSpec((C_out, hidden), lambda i: (0, 0)),   # w2
                pl.BlockSpec((C_out, 1), lambda i: (0, 0)),        # b2
            ],
            # batch on lanes, tb % 128 == 0 -> unmasked, lane-dense stores
            out_specs=pl.BlockSpec((C_out, tb), lambda i: (0, i)),
        ),
        compiler_params=pltpu.CompilerParams(
            dimension_semantics=("parallel",),
        ),
        cost_estimate=cost,
    )(x, w1, b1c, w2, b2c)

    # (C_out, b_pad) -> (B, C_out); transposing this small slab is cheap.
    return out_t[:, :B].T


def _reference(x, w1, b1, w2, b2):
    h = jnp.maximum(x @ w1.T + b1, 0.0)
    return h @ w2.T + b2


if __name__ == "__main__":
    # Small, deterministic shapes consistent with the module:
    #   in_channel=32, hidden=64 (fixed by the module), num_classes=10, batch=16.
    B, C_in, HID, C_out = 16, 32, 64, 10

    key = jax.random.PRNGKey(0)
    kx, k1, kb1, k2, kb2 = jax.random.split(key, 5)

    x = jax.random.normal(kx, (B, C_in), dtype=jnp.float32)

    # Deterministic parameter init (uniform, Kaiming-style bounds like nn.Linear),
    # stored in native PyTorch weight layout.
    bound1 = 1.0 / (C_in ** 0.5)
    w1 = jax.random.uniform(k1, (HID, C_in), jnp.float32, -bound1, bound1)
    b1 = jax.random.uniform(kb1, (HID,), jnp.float32, -bound1, bound1)
    bound2 = 1.0 / (HID ** 0.5)
    w2 = jax.random.uniform(k2, (C_out, HID), jnp.float32, -bound2, bound2)
    b2 = jax.random.uniform(kb2, (C_out,), jnp.float32, -bound2, bound2)

    y = specific_classifier(x, w1, b1, w2, b2)
    y = jax.block_until_ready(y)

    y_ref = _reference(x, w1, b1, w2, b2)
    assert y.shape == (B, C_out)
    assert jnp.allclose(y, y_ref, atol=1e-5, rtol=1e-5), "mismatch vs reference"

    print("KERNEL_OK")
</pallas_src>

<mosaic_0001>
module attributes {stable_mosaic.version = 11 : i64} {
  func.func @_mlp_kernel(%arg0: i32, %arg1: memref<128x32xf32, #tpu.memory_space<vmem>>, %arg2: memref<64x32xf32, #tpu.memory_space<vmem>>, %arg3: memref<64x1xf32, #tpu.memory_space<vmem>>, %arg4: memref<10x64xf32, #tpu.memory_space<vmem>>, %arg5: memref<10x1xf32, #tpu.memory_space<vmem>>, %arg6: memref<10x128xf32, #tpu.memory_space<vmem>>) attributes {dimension_semantics = [#tpu.dimension_semantics<parallel>], iteration_bounds = array<i64: 1>, scalar_prefetch = 0 : i64, scratch_operands = 0 : i64, tpu.core_type = #tpu.core_type<tc>, window_params = [{transform_indices = @transform_0, window_bounds = array<i64: 128, 32>}, {pipeline_mode = #tpu.pipeline_mode<synchronous>, transform_indices = @transform_1, window_bounds = array<i64: 64, 32>}, {pipeline_mode = #tpu.pipeline_mode<synchronous>, transform_indices = @transform_2, window_bounds = array<i64: 64, 1>}, {pipeline_mode = #tpu.pipeline_mode<synchronous>, transform_indices = @transform_3, window_bounds = array<i64: 10, 64>}, {pipeline_mode = #tpu.pipeline_mode<synchronous>, transform_indices = @transform_4, window_bounds = array<i64: 10, 1>}, {transform_indices = @transform_5, window_bounds = array<i64: 10, 128>}]} {
    %c0 = arith.constant 0 : index
    %c0_0 = arith.constant 0 : index
    %0 = vector.load %arg2[%c0, %c0_0] : memref<64x32xf32, #tpu.memory_space<vmem>>, vector<64x32xf32>
    %c0_1 = arith.constant 0 : index
    %c0_2 = arith.constant 0 : index
    %1 = vector.load %arg1[%c0_1, %c0_2] : memref<128x32xf32, #tpu.memory_space<vmem>>, vector<128x32xf32>
    %cst = arith.constant dense<0.000000e+00> : vector<64x128xf32>
    %2 = tpu.matmul %0, %1, %cst {dimension_numbers = #tpu.dot_dimension_numbers<[1], [1], [0], [0], [0, 0, 1, 0], [], []>} : vector<64x32xf32>, vector<128x32xf32>, vector<64x128xf32> -> vector<64x128xf32>
    %c0_3 = arith.constant 0 : index
    %c0_4 = arith.constant 0 : index
    %3 = vector.load %arg3[%c0_3, %c0_4] : memref<64x1xf32, #tpu.memory_space<vmem>>, vector<64x1xf32>
    %4 = vector.broadcast %3 : vector<64x1xf32> to vector<64x128xf32>
    %5 = arith.addf %2, %4 : vector<64x128xf32>
    %cst_5 = arith.constant 0.000000e+00 : f32
    %6 = vector.broadcast %cst_5 : f32 to vector<64x128xf32>
    %7 = arith.maximumf %5, %6 : vector<64x128xf32>
    %c0_6 = arith.constant 0 : index
    %c0_7 = arith.constant 0 : index
    %8 = vector.load %arg4[%c0_6, %c0_7] : memref<10x64xf32, #tpu.memory_space<vmem>>, vector<10x64xf32>
    %cst_8 = arith.constant dense<0.000000e+00> : vector<10x128xf32>
    %9 = tpu.matmul %8, %7, %cst_8 {dimension_numbers = #tpu.dot_dimension_numbers<[1], [0], [0], [1], [0, 0, 1, 1], [], []>} : vector<10x64xf32>, vector<64x128xf32>, vector<10x128xf32> -> vector<10x128xf32>
    %c0_9 = arith.constant 0 : index
    %c0_10 = arith.constant 0 : index
    %10 = vector.load %arg5[%c0_9, %c0_10] : memref<10x1xf32, #tpu.memory_space<vmem>>, vector<10x1xf32>
    %11 = vector.broadcast %10 : vector<10x1xf32> to vector<10x128xf32>
    %12 = arith.addf %9, %11 : vector<10x128xf32>
    %c0_11 = arith.constant 0 : index
    %c0_12 = arith.constant 0 : index
    %13 = vector.load %arg6[%c0_11, %c0_12] : memref<10x128xf32, #tpu.memory_space<vmem>>, vector<10x128xf32>
    tpu.vector_store %arg6[%c0_11, %c0_12], %12 {strides = array<i32>} : memref<10x128xf32, #tpu.memory_space<vmem>>, vector<10x128xf32>,
    return
  }
  func.func @transform_0(%arg0: i32) -> (i32, i32) {
    %c0_i32 = arith.constant 0 : i32
    %c0_i32_0 = arith.constant 0 : i32
    return %arg0, %c0_i32 : i32, i32
  }
  func.func @transform_1(%arg0: i32) -> (i32, i32) {
    %c0_i32 = arith.constant 0 : i32
    %c0_i32_0 = arith.constant 0 : i32
    %c0_i32_1 = arith.constant 0 : i32
    return %c0_i32, %c0_i32_0 : i32, i32
  }
  func.func @transform_2(%arg0: i32) -> (i32, i32) {
    %c0_i32 = arith.constant 0 : i32
    %c0_i32_0 = arith.constant 0 : i32
    %c0_i32_1 = arith.constant 0 : i32
    return %c0_i32, %c0_i32_0 : i32, i32
  }
  func.func @transform_3(%arg0: i32) -> (i32, i32) {
    %c0_i32 = arith.constant 0 : i32
    %c0_i32_0 = arith.constant 0 : i32
    %c0_i32_1 = arith.constant 0 : i32
    return %c0_i32, %c0_i32_0 : i32, i32
  }
  func.func @transform_4(%arg0: i32) -> (i32, i32) {
    %c0_i32 = arith.constant 0 : i32
    %c0_i32_0 = arith.constant 0 : i32
    %c0_i32_1 = arith.constant 0 : i32
    return %c0_i32, %c0_i32_0 : i32, i32
  }
  func.func @transform_5(%arg0: i32) -> (i32, i32) {
    %c0_i32 = arith.constant 0 : i32
    %c0_i32_0 = arith.constant 0 : i32
    return %c0_i32, %arg0 : i32, i32
  }
}

</mosaic_0001>

<llo_original>
// kernel: tpu_custom_call.1
$region0: #{tpu_custom_call.1}
  #allocation0 [shape = 'u32[]', space=smem, size = 0x4, offset = 0x4, fixed_abs, tag = 'smem constant byte address 0x4 - core index']
  #allocation1 [shape = 'u32[72,128]{1,0:T(1,128)}', space=vmem, size = 0x9000, scoped, tag = 'internal scratch']
  %s0 = inlined_call_operand.vmem [shape: f32[128,32], index: 0, kind: input, shape index: {}]
  %s1 = inlined_call_operand.vmem [shape: f32[64,32], index: 1, kind: input, shape index: {}]
  %s2 = inlined_call_operand.vmem [shape: f32[64,1], index: 2, kind: input, shape index: {}]
  %s3 = inlined_call_operand.vmem [shape: f32[10,64], index: 3, kind: input, shape index: {}]
  %s4 = inlined_call_operand.vmem [shape: f32[10,1], index: 4, kind: input, shape index: {}]
  %s5 = inlined_call_operand.hbm [shape: f32[10,128], index: 5, kind: output, shape index: {}]
  %s6 = sld [smem:[#allocation0]]
  $region30: #{tpu_custom_call.1} parent=0
    _
  %s8 = ssub.s32 1, %s6
  %s9 = scalar_select 0, %s8, %s6
  $region1: #{tpu_custom_call.1} parent=0
    #allocation2 [shape = 'u8[8192]{0}', space=vmem, size = 0x2000, scoped, tag = 'output window, operand 0, single buffered']
    #allocation3 [shape = 's32[1]{0}', space=sflag, size = 0x4, scoped, tag = 'scoped memory for tpu_custom_call.1']
    %10 = vsyncpa [#allocation3], 0
    // Predicated region
    $region2: #{tpu_custom_call.1} parent=1 // pred_check
      _
    $region3: #{tpu_custom_call.1} parent=1 // pred_check_branch
      %12 = sbr.rel (0) target = $region5
    $region4: #{tpu_custom_call.1} parent=1 // pred_region
      _
    $region5: #{tpu_custom_call.1} parent=1 // pred_fallthru
      _
    // Predicated region
    $region6: #{tpu_custom_call.1} parent=1 // pred_check
      _
    $region7: #{tpu_custom_call.1} parent=1 // pred_check_branch
      %14 = sbr.rel (0) target = $region9
    $region8: #{tpu_custom_call.1} parent=1 // pred_region
      _
    $region9: #{tpu_custom_call.1} parent=1 // pred_fallthru
      _
    // Predicated region
    $region10: #{tpu_custom_call.1} parent=1 // pred_check
      _
    $region11: #{tpu_custom_call.1} parent=1 // pred_check_branch
      %16 = sbr.rel (0) target = $region13
    $region12: #{tpu_custom_call.1} parent=1 // pred_region
      _
    $region13: #{tpu_custom_call.1} parent=1 // pred_fallthru
      _
    // Predicated region
    $region14: #{tpu_custom_call.1} parent=1 // pred_check
      _
    $region15: #{tpu_custom_call.1} parent=1 // pred_check_branch
      %18 = sbr.rel (0) target = $region17
    $region16: #{tpu_custom_call.1} parent=1 // pred_region
      _
    $region17: #{tpu_custom_call.1} parent=1 // pred_fallthru
      _
    // Predicated region
    $region18: #{tpu_custom_call.1} parent=1 // pred_check
      _
    $region19: #{tpu_custom_call.1} parent=1 // pred_check_branch
      %20 = sbr.rel (0) target = $region21
    $region20: #{tpu_custom_call.1} parent=1 // pred_region
      _
    $region21: #{tpu_custom_call.1} parent=1 // pred_fallthru
      _
    %v21 = vld [vmem:[%s1] sm:$0xff]
    %v22 = vld [vmem:[%s1 + $0x8] sm:$0xff]
    %v23 = vld [vmem:[%s1 + $0x10] sm:$0xff]
    %v24 = vld [vmem:[%s1 + $0x18] sm:$0xff]
    %v25 = vld [vmem:[%s1 + $0x20] sm:$0xff]
    %v26 = vld [vmem:[%s1 + $0x28] sm:$0xff]
    %v27 = vld [vmem:[%s1 + $0x30] sm:$0xff]
    %v28 = vld [vmem:[%s1 + $0x38] sm:$0xff]
    %v29 = vld [vmem:[%s0] sm:$0xff]
    %v30 = vld [vmem:[%s0 + $0x8] sm:$0xff]
    %v31 = vld [vmem:[%s0 + $0x10] sm:$0xff]
    %v32 = vld [vmem:[%s0 + $0x18] sm:$0xff]
    %v33 = vld [vmem:[%s0 + $0x20] sm:$0xff]
    %v34 = vld [vmem:[%s0 + $0x28] sm:$0xff]
    %v35 = vld [vmem:[%s0 + $0x30] sm:$0xff]
    %v36 = vld [vmem:[%s0 + $0x38] sm:$0xff]
    %v37 = vld [vmem:[%s0 + $0x40] sm:$0xff]
    %v38 = vld [vmem:[%s0 + $0x48] sm:$0xff]
    %v39 = vld [vmem:[%s0 + $0x50] sm:$0xff]
    %v40 = vld [vmem:[%s0 + $0x58] sm:$0xff]
    %v41 = vld [vmem:[%s0 + $0x60] sm:$0xff]
    %v42 = vld [vmem:[%s0 + $0x68] sm:$0xff]
    %v43 = vld [vmem:[%s0 + $0x70] sm:$0xff]
    %v44 = vld [vmem:[%s0 + $0x78] sm:$0xff]
    %v45 = vld [vmem:[%s2] sm:$0xff]
    %v46 = vld [vmem:[%s2 + $0x8] sm:$0xff]
    %v47 = vld [vmem:[%s2 + $0x10] sm:$0xff]
    %v48 = vld [vmem:[%s2 + $0x18] sm:$0xff]
    %v49 = vld [vmem:[%s2 + $0x20] sm:$0xff]
    %v50 = vld [vmem:[%s2 + $0x28] sm:$0xff]
    %v51 = vld [vmem:[%s2 + $0x30] sm:$0xff]
    %v52 = vld [vmem:[%s2 + $0x38] sm:$0xff]
    %54 = vset.pattern.permute.xlu0 0
    %55 = vperm.xlu0 %54, %v45
    %v56 = vpop.permute.xlu0 %55
    %59 = vset.pattern.permute.xlu0 0
    %60 = vperm.xlu0 %59, %v46
    %v61 = vpop.permute.xlu0 %60
    %64 = vset.pattern.permute.xlu0 0
    %65 = vperm.xlu0 %64, %v47
    %v66 = vpop.permute.xlu0 %65
    %69 = vset.pattern.permute.xlu0 0
    %70 = vperm.xlu0 %69, %v48
    %v71 = vpop.permute.xlu0 %70
    %74 = vset.pattern.permute.xlu0 0
    %75 = vperm.xlu0 %74, %v49
    %v76 = vpop.permute.xlu0 %75
    %79 = vset.pattern.permute.xlu0 0
    %80 = vperm.xlu0 %79, %v50
    %v81 = vpop.permute.xlu0 %80
    %84 = vset.pattern.permute.xlu0 0
    %85 = vperm.xlu0 %84, %v51
    %v86 = vpop.permute.xlu0 %85
    %89 = vset.pattern.permute.xlu0 0
    %90 = vperm.xlu0 %89, %v52
    %v91 = vpop.permute.xlu0 %90
    %vm93 = vcmask 261120
    %v95 = vsel %vm93, %v21, 0
    %v98 = vsel %vm93, %v22, 0
    %v101 = vsel %vm93, %v23, 0
    %v104 = vsel %vm93, %v24, 0
    %v107 = vsel %vm93, %v25, 0
    %v110 = vsel %vm93, %v26, 0
    %v113 = vsel %vm93, %v27, 0
    %v116 = vsel %vm93, %v28, 0
    %v119 = vsel %vm93, %v29, 0
    %v122 = vsel %vm93, %v30, 0
    %v125 = vsel %vm93, %v31, 0
    %v128 = vsel %vm93, %v32, 0
    %v131 = vsel %vm93, %v33, 0
    %v134 = vsel %vm93, %v34, 0
    %v137 = vsel %vm93, %v35, 0
    %v140 = vsel %vm93, %v36, 0
    %v143 = vsel %vm93, %v37, 0
    %v146 = vsel %vm93, %v38, 0
    %v149 = vsel %vm93, %v39, 0
    %v152 = vsel %vm93, %v40, 0
    %v155 = vsel %vm93, %v41, 0
    %v158 = vsel %vm93, %v42, 0
    %v161 = vsel %vm93, %v43, 0
    %v164 = vsel %vm93, %v44, 0
    %166 = vmatpush.xpose.msra.mxu0 %v164
    %167 = vmatpush.xpose.msra.mxu0 %v161
    %168 = vmatpush.xpose.msra.mxu0 %v158
    %169 = vmatpush.xpose.msra.mxu0 %v155
    %170 = vmatpush.xpose.msra.mxu0 %v152
    %171 = vmatpush.xpose.msra.mxu0 %v149
    %172 = vmatpush.xpose.msra.mxu0 %v146
    %173 = vmatpush.xpose.msra.mxu0 %v143
    %174 = vmatpush.xpose.msra.mxu0 %v140
    %175 = vmatpush.xpose.msra.mxu0 %v137
    %176 = vmatpush.xpose.msra.mxu0 %v134
    %177 = vmatpush.xpose.msra.mxu0 %v131
    %178 = vmatpush.xpose.msra.mxu0 %v128
    %179 = vmatpush.xpose.msra.mxu0 %v125
    %180 = vmatpush.xpose.msra.mxu0 %v122
    %181 = vmatpush.xpose.msra.mxu0 %v119
    %182 = vmatmul.f32.gmra.mxu0 %v95
    %v183 = vpop.f32.mrf.mxu0
    %v184 = vadd.f32 %v56, %v183
    %185 = vmatmul.f32.gmra.mxu0 %v98
    %v186 = vpop.f32.mrf.mxu0
    %v187 = vadd.f32 %v61, %v186
    %188 = vmatmul.f32.gmra.mxu0 %v101
    %v189 = vpop.f32.mrf.mxu0
    %v190 = vadd.f32 %v66, %v189
    %191 = vmatmul.f32.gmra.mxu0 %v104
    %v192 = vpop.f32.mrf.mxu0
    %v193 = vadd.f32 %v71, %v192
    %194 = vmatmul.f32.gmra.mxu0 %v107
    %v195 = vpop.f32.mrf.mxu0
    %v196 = vadd.f32 %v76, %v195
    %197 = vmatmul.f32.gmra.mxu0 %v110
    %v198 = vpop.f32.mrf.mxu0
    %v199 = vadd.f32 %v81, %v198
    %200 = vmatmul.f32.gmra.mxu0 %v113
    %v201 = vpop.f32.mrf.mxu0
    %v202 = vadd.f32 %v86, %v201
    %203 = vmatmul.f32.gmra.mxu0 %v116
    %v204 = vpop.f32.mrf.mxu0
    %v205 = vadd.f32 %v91, %v204
    %206 = vdwg.mxu0
    %v207 = vmax.f32 %v184, 0.0
    %v208 = vmax.f32 %v187, 0.0
    %v209 = vmax.f32 %v190, 0.0
    %v210 = vmax.f32 %v193, 0.0
    %v211 = vmax.f32 %v196, 0.0
    %v212 = vmax.f32 %v199, 0.0
    %v213 = vmax.f32 %v202, 0.0
    %v214 = vmax.f32 %v205, 0.0
    %v215 = vld [vmem:[%s3] sm:$0xff]
    %v216 = vld [vmem:[%s3 + $0x8] sm:$0x3]
    %v217 = vld [vmem:[%s4] sm:$0xff]
    %v218 = vld [vmem:[%s4 + $0x8] sm:$0x3]
    %220 = vset.pattern.permute.xlu0 0
    %221 = vperm.xlu0 %220, %v217
    %v222 = vpop.permute.xlu0 %221
    %225 = vset.pattern.permute.xlu0 0
    %226 = vperm.xlu0 %225, %v218
    %v227 = vpop.permute.xlu0 %226
    %vm229 = vcmask 523264
    %v231 = vsel %vm229, %v215, 0
    %v234 = vsel %vm229, %v216, 0
    %236 = vmatpush.msra.mxu0 0.0
    %237 = vmatpush.msra.mxu0 0.0
    %238 = vmatpush.msra.mxu0 0.0
    %239 = vmatpush.msra.mxu0 0.0
    %240 = vmatpush.msra.mxu0 0.0
    %241 = vmatpush.msra.mxu0 0.0
    %242 = vmatpush.msra.mxu0 0.0
    %243 = vmatpush.msra.mxu0 0.0
    %244 = vmatpush.msra.mxu0 %v214
    %245 = vmatpush.msra.mxu0 %v213
    %246 = vmatpush.msra.mxu0 %v212
    %247 = vmatpush.msra.mxu0 %v211
    %248 = vmatpush.msra.mxu0 %v210
    %249 = vmatpush.msra.mxu0 %v209
    %250 = vmatpush.msra.mxu0 %v208
    %251 = vmatpush.msra.mxu0 %v207
    %252 = vmatmul.f32.gmra.mxu0 %v231
    %v253 = vpop.f32.mrf.mxu0
    %v254 = vadd.f32 %v222, %v253
    %255 = vmatmul.f32.gmra.mxu0 %v234
    %v256 = vpop.f32.mrf.mxu0
    %v257 = vadd.f32 %v227, %v256
    %258 = vdwg.mxu0
    %259 = vst [vmem:[#allocation2] sm:$0xff] %v254
    %260 = vst [vmem:[#allocation2 + $0x8] sm:$0x3] %v257
    // Predicated region
    $region22: #{tpu_custom_call.1} parent=1 // pred_check
      _
    $region23: #{tpu_custom_call.1} parent=1 // pred_check_branch
      %262 = sbr.rel (0) target = $region25
    $region24: #{tpu_custom_call.1} parent=1 // pred_region
      %264 = vsyncadd [#allocation3], 0
      %s265 = sshll.u32 [#allocation2], 4
      %s266 = int_to_ptr.vmem [resolvable:$true] %s265
      %s267 = sshll.u32 %s5, 4
      %s268 = int_to_ptr.hbm [resolvable:$true] %s267
      %273 = dma.vmem_to_hbm [thread:$0]  %s266, 256, %s268, [#allocation3], 128, 128, 8
    $region25: #{tpu_custom_call.1} parent=1 // pred_fallthru
      _
    // Predicated region
    $region26: #{tpu_custom_call.1} parent=1 // pred_check
      _
    $region27: #{tpu_custom_call.1} parent=1 // pred_check_branch
      %275 = sbr.rel (0) target = $region29
    $region28: #{tpu_custom_call.1} parent=1 // pred_region
      %277 = dma.done [#allocation3], 256
    $region29: #{tpu_custom_call.1} parent=1 // pred_fallthru
      _
    %278 = vsyncpa [#allocation3], 1

</llo_original>
